<compile_context>
chip_gen: v5e
topology: v5e:2x2
jax: 0.10.0
libtpu: 0.0.40
codegen_flags: <defaults>
</compile_context>

<pallas_src>
import math
import numpy as np
import jax
import jax.numpy as jnp
from jax.experimental import pallas as pl
from jax.experimental.pallas import tpu as pltpu


def _gelu_tanh(z):
    # tanh-based GELU: one EUP tanh + a few VALU ops.
    c = math.sqrt(2.0 / math.pi)
    return 0.5 * z * (1.0 + jnp.tanh(c * (z + 0.044715 * z * z * z)))


def _make_kernel(C, H, W, Bt, eps=1e-6):
    N = H * W
    L = Bt * N          # packed spatial lanes (Bt images side by side)

    def kernel(x_ref, par_ref, msk_ref, w_ref, mr_ref, mi_ref, nr_ref, ni_ref,
               seg_ref, out_ref):
        # par_ref columns: 0..8 = CPE 3x3 taps, 9 = ln_w, 10 = ln_b, 11 = cpe_b,
        #                  12 = bv, 13 = layer_scale (per channel), 14 = bp.
        # msk_ref rows:    0..2 = h-validity for dh=-1,0,1 ; 3..5 = w-validity.
        x = x_ref[...]                                   # (C, L) f32 (also shortcut)

        # ---- CPE: depthwise 3x3, padding=1 on raw x (XLU rolls + 0/1 masks) ----
        pos = jnp.zeros((C, L), jnp.float32)
        for ih, dh in enumerate((-1, 0, 1)):
            if dh == 0:
                xh = x
            else:
                xh = pltpu.roll(x, shift=(-dh * W) % L, axis=1) * msk_ref[ih:ih + 1, :]
            for iw, dw in enumerate((-1, 0, 1)):
                if dw == 0:
                    xv = xh
                else:
                    xv = pltpu.roll(xh, shift=(-dw) % L, axis=1) * msk_ref[3 + iw:4 + iw, :]
                t = ih * 3 + iw
                pos = pos + xv * par_ref[:, t:t + 1]
        pos = pos + par_ref[:, 11:12]                    # CPE bias

        # ---- LayerNorm over channels (channels_first) ----
        u = jnp.mean(x, axis=0, keepdims=True)
        xc = x - u
        var = jnp.mean(xc * xc, axis=0, keepdims=True)
        xn = xc * jax.lax.rsqrt(var + eps)
        xn = xn * par_ref[:, 9:10] + par_ref[:, 10:11]
        xn_b = xn.astype(jnp.bfloat16)

        # ---- FourierUnit: rfft2 -> 1x1 conv (2C->2C, no bias) -> GELU -> irfft2 ----
        re = jnp.dot(xn_b, mr_ref[...], preferred_element_type=jnp.float32)   # (C, F)
        im = jnp.dot(xn_b, mi_ref[...], preferred_element_type=jnp.float32)   # (C, F)
        re_b = re.astype(jnp.bfloat16)
        im_b = im.astype(jnp.bfloat16)
        wrr = w_ref[2 * C:3 * C, :]
        wri = w_ref[3 * C:4 * C, :]
        wir = w_ref[4 * C:5 * C, :]
        wii = w_ref[5 * C:6 * C, :]
        fr = (jnp.dot(wrr, re_b, preferred_element_type=jnp.float32)
              + jnp.dot(wri, im_b, preferred_element_type=jnp.float32))
        fi = (jnp.dot(wir, re_b, preferred_element_type=jnp.float32)
              + jnp.dot(wii, im_b, preferred_element_type=jnp.float32))
        fr = _gelu_tanh(fr)
        fi = _gelu_tanh(fi)
        a = (jnp.dot(fr.astype(jnp.bfloat16), nr_ref[...],
                     preferred_element_type=jnp.float32)
             + jnp.dot(fi.astype(jnp.bfloat16), ni_ref[...],
                       preferred_element_type=jnp.float32))                   # (C, L)

        # ---- v = 1x1 conv (with bias) on normalized x ----
        v = (jnp.dot(w_ref[0:C, :], xn_b, preferred_element_type=jnp.float32)
             + par_ref[:, 12:13])

        # ---- per-head layer_scale modulation + per-image softmax over N ----
        attn = par_ref[:, 13:14] * a * v                  # (C, L)
        m = jnp.max(attn, axis=1, keepdims=True)          # per-row const: softmax-safe
        e = jnp.exp(attn - m)
        # segmented sums: seg is block-diag ones (bf16), one block per packed image
        ssum = jnp.dot(e.astype(jnp.bfloat16), seg_ref[...],
                       preferred_element_type=jnp.float32)
        sm = e * pl.reciprocal(ssum, approx=True)

        # ---- add CPE pos-embed, 1x1 proj, residual ----
        xs = (sm + pos).astype(jnp.bfloat16)
        y = (jnp.dot(w_ref[C:2 * C, :], xs, preferred_element_type=jnp.float32)
             + par_ref[:, 14:15])
        out_ref[...] = y + x

    return kernel


def _dft_matrices(H, W):
    """Real cos/sin matrices reproducing rfft2/irfft2 (norm='ortho') as matmuls."""
    Wf = W // 2 + 1
    N = H * W
    hh, uu = np.arange(H), np.arange(H)
    ww, kk = np.arange(W), np.arange(Wf)
    s = 1.0 / np.sqrt(N)
    # forward: X[u,k] = s * sum_{h,w} x[h,w] exp(-2i*pi*(u*h/H + k*w/W))
    th_f = 2.0 * np.pi * (np.outer(hh, uu)[:, None, :, None] / H +
                          np.outer(ww, kk)[None, :, None, :] / W)          # [h,w,u,k]
    MR = (s * np.cos(th_f)).reshape(N, H * Wf)
    MI = (-s * np.sin(th_f)).reshape(N, H * Wf)
    # inverse one-sided c2r: interior k doubled, imag of k=0 / k=W/2 dropped.
    ck = np.where((kk == 0) | ((W % 2 == 0) & (kk == W // 2)), 1.0, 2.0)
    th_i = 2.0 * np.pi * (np.outer(uu, hh)[:, None, :, None] / H +
                          np.outer(kk, ww)[None, :, None, :] / W)          # [u,k,h,w]
    NR = (s * ck[None, :, None, None] * np.cos(th_i)).reshape(H * Wf, N)
    NI = (-s * ck[None, :, None, None] * np.sin(th_i)).reshape(H * Wf, N)
    return MR, MI, NR, NI


def _block_diag(m, bt):
    if bt == 1:
        return m
    r, c = m.shape
    out = np.zeros((bt * r, bt * c), m.dtype)
    for b in range(bt):
        out[b * r:(b + 1) * r, b * c:(b + 1) * c] = m
    return out


def init_params(key, dim, num_heads):
    ks = jax.random.split(key, 7)
    return {
        "num_heads": num_heads,
        "ln_w": jnp.ones((dim,), jnp.float32),
        "ln_b": jnp.zeros((dim,), jnp.float32),
        "cpe_w": 0.2 * jax.random.normal(ks[0], (dim, 3, 3), jnp.float32),
        "cpe_b": 0.1 * jax.random.normal(ks[1], (dim,), jnp.float32),
        "wa": 0.2 * jax.random.normal(ks[2], (2 * dim, 2 * dim), jnp.float32),
        "wv": 0.2 * jax.random.normal(ks[3], (dim, dim), jnp.float32),
        "bv": 0.1 * jax.random.normal(ks[4], (dim,), jnp.float32),
        "layer_scale": 1e-6 * jnp.ones((num_heads,), jnp.float32),
        "wp": 0.2 * jax.random.normal(ks[5], (dim, dim), jnp.float32),
        "bp": 0.1 * jax.random.normal(ks[6], (dim,), jnp.float32),
    }


def fconvmod_pallas(x, p):
    B, C, H, W = x.shape
    N = H * W
    heads = p["num_heads"]

    # Pack Bt images along the lane axis when the spatial extent is lane-sparse.
    Bt = 1
    if N < 128 and 128 % N == 0:
        cand = 128 // N
        while cand > 1 and B % cand != 0:
            cand -= 1
        Bt = cand
    G = B // Bt
    L = Bt * N

    # DFT matrices (per image), block-diagonal over packed images, bf16 for MXU.
    MR, MI, NR, NI = _dft_matrices(H, W)
    mr = jnp.asarray(_block_diag(MR, Bt), jnp.bfloat16)
    mi = jnp.asarray(_block_diag(MI, Bt), jnp.bfloat16)
    nr = jnp.asarray(_block_diag(NR, Bt), jnp.bfloat16)
    ni = jnp.asarray(_block_diag(NI, Bt), jnp.bfloat16)
    # segmented-softmax sum matrix: ones within each image's lane block (bf16 MXU).
    seg = jnp.asarray(np.kron(np.eye(Bt), np.ones((N, N))), jnp.bfloat16)

    # CPE validity masks (per lane, 0/1): rows 0..2 h-valid (dh=-1,0,1), 3..5 w-valid.
    pcol = np.arange(L) % W
    prow = (np.arange(L) % N) // W
    msk_np = np.zeros((8, L), np.float32)
    for idx, d in enumerate((-1, 0, 1)):
        msk_np[idx] = ((prow + d >= 0) & (prow + d < H)).astype(np.float32)
        msk_np[3 + idx] = ((pcol + d >= 0) & (pcol + d < W)).astype(np.float32)
    msk = jnp.asarray(msk_np)

    # freq 1x1-conv weight: torch interleaved (re,im) channel order -> 4 CxC blocks.
    perm = np.concatenate([np.arange(0, 2 * C, 2), np.arange(1, 2 * C, 2)])
    wa_g = p["wa"][perm][:, perm]
    wrr, wri = wa_g[:C, :C], wa_g[:C, C:]
    wir, wii = wa_g[C:, :C], wa_g[C:, C:]
    w_all = jnp.concatenate([p["wv"], p["wp"], wrr, wri, wir, wii],
                            axis=0).astype(jnp.bfloat16)                 # (6C, C)

    # per-head layer_scale -> per channel; pack small per-channel params into (C,16).
    scale_c = jnp.repeat(p["layer_scale"], C // heads)
    par = jnp.concatenate(
        [p["cpe_w"].reshape(C, 9),
         p["ln_w"].reshape(C, 1), p["ln_b"].reshape(C, 1),
         p["cpe_b"].reshape(C, 1), p["bv"].reshape(C, 1),
         scale_c.reshape(C, 1), p["bp"].reshape(C, 1),
         jnp.zeros((C, 1), jnp.float32)], axis=1).astype(jnp.float32)    # (C, 16)

    # pack images along lanes: (B,C,H,W) -> (G, C, Bt*N)
    xp = x.astype(jnp.float32).reshape(G, Bt, C, N)
    xp = xp.transpose(0, 2, 1, 3).reshape(G, C, L)

    kernel = _make_kernel(C, H, W, Bt)

    def full(q):
        return pl.BlockSpec(q.shape, lambda b: (0, 0))

    out = pl.pallas_call(
        kernel,
        out_shape=jax.ShapeDtypeStruct((G, C, L), jnp.float32),
        grid=(G,),
        in_specs=[pl.BlockSpec((None, C, L), lambda b: (b, 0, 0)),
                  full(par), full(msk), full(w_all),
                  full(mr), full(mi), full(nr), full(ni), full(seg)],
        out_specs=pl.BlockSpec((None, C, L), lambda b: (b, 0, 0)),
        compiler_params=pltpu.CompilerParams(
            dimension_semantics=("parallel",),
            vmem_limit_bytes=32 * 1024 * 1024),
    )(xp, par, msk, w_all, mr, mi, nr, ni, seg)

    out = out.reshape(G, C, Bt, N).transpose(0, 2, 1, 3).reshape(B, C, H, W)
    return out


def fconvmod_ref(x, p):
    """Pure-JAX reference mirroring the PyTorch forward (for validation)."""
    B, C, H, W = x.shape
    N = H * W
    heads = p["num_heads"]
    eps = 1e-6
    shortcut = x
    pos = jax.lax.conv_general_dilated(
        x, p["cpe_w"].reshape(C, 1, 3, 3), window_strides=(1, 1),
        padding=((1, 1), (1, 1)),
        dimension_numbers=("NCHW", "OIHW", "NCHW"), feature_group_count=C)
    pos = pos + p["cpe_b"].reshape(1, C, 1, 1)

    u = x.mean(axis=1, keepdims=True)
    s = ((x - u) ** 2).mean(axis=1, keepdims=True)
    xn = (x - u) / jnp.sqrt(s + eps)
    xn = p["ln_w"].reshape(1, C, 1, 1) * xn + p["ln_b"].reshape(1, C, 1, 1)

    ff = jnp.fft.rfft2(xn, norm="ortho")
    Wf = ff.shape[-1]
    fri = jnp.stack([ff.real, ff.imag], axis=2).reshape(B, 2 * C, H, Wf)
    fri = jnp.einsum("oi,bihw->bohw", p["wa"], fri)
    fri = jax.nn.gelu(fri, approximate=False)
    fri = fri.reshape(B, C, 2, H, Wf)
    a = jnp.fft.irfft2(fri[:, :, 0] + 1j * fri[:, :, 1], s=(H, W), norm="ortho")

    v = jnp.einsum("oi,bihw->bohw", p["wv"], xn) + p["bv"].reshape(1, C, 1, 1)

    a2 = a.reshape(B, heads, C // heads, N)
    v2 = v.reshape(B, heads, C // heads, N)
    attn = p["layer_scale"].reshape(1, heads, 1, 1) * (a2 * v2)
    attn = jax.nn.softmax(attn, axis=-1)
    xo = attn.reshape(B, C, H, W) + pos
    xo = jnp.einsum("oi,bihw->bohw", p["wp"], xo) + p["bp"].reshape(1, C, 1, 1)
    return xo + shortcut


if __name__ == "__main__":
    B, C, H, W, heads = 2, 16, 8, 8, 4
    key = jax.random.PRNGKey(0)
    pkey, xkey = jax.random.split(key)
    params = init_params(pkey, C, heads)
    x = jax.random.normal(xkey, (B, C, H, W), dtype=jnp.float32)

    out = jax.block_until_ready(fconvmod_pallas(x, params))
    ref = fconvmod_ref(x, params)
    err = float(jnp.max(jnp.abs(out - ref)))
    assert out.shape == (B, C, H, W) and err < 2e-2, f"mismatch: max abs err = {err}"
    print("KERNEL_OK")
</pallas_src>

<mosaic_0001>
module attributes {stable_mosaic.version = 11 : i64} {
  func.func @kernel(%arg0: i32, %arg1: memref<1x16x128xf32, #tpu.memory_space<vmem>>, %arg2: memref<16x16xf32, #tpu.memory_space<vmem>>, %arg3: memref<8x128xf32, #tpu.memory_space<vmem>>, %arg4: memref<96x16xbf16, #tpu.memory_space<vmem>>, %arg5: memref<128x80xbf16, #tpu.memory_space<vmem>>, %arg6: memref<128x80xbf16, #tpu.memory_space<vmem>>, %arg7: memref<80x128xbf16, #tpu.memory_space<vmem>>, %arg8: memref<80x128xbf16, #tpu.memory_space<vmem>>, %arg9: memref<128x128xbf16, #tpu.memory_space<vmem>>, %arg10: memref<1x16x128xf32, #tpu.memory_space<vmem>>) attributes {dimension_semantics = [#tpu.dimension_semantics<parallel>], iteration_bounds = array<i64: 1>, scalar_prefetch = 0 : i64, scratch_operands = 0 : i64, tpu.core_type = #tpu.core_type<tc>, window_params = [{transform_indices = @transform_0, window_bounds = array<i64: 1, 16, 128>}, {pipeline_mode = #tpu.pipeline_mode<synchronous>, transform_indices = @transform_1, window_bounds = array<i64: 16, 16>}, {pipeline_mode = #tpu.pipeline_mode<synchronous>, transform_indices = @transform_2, window_bounds = array<i64: 8, 128>}, {pipeline_mode = #tpu.pipeline_mode<synchronous>, transform_indices = @transform_3, window_bounds = array<i64: 96, 16>}, {pipeline_mode = #tpu.pipeline_mode<synchronous>, transform_indices = @transform_4, window_bounds = array<i64: 128, 80>}, {pipeline_mode = #tpu.pipeline_mode<synchronous>, transform_indices = @transform_5, window_bounds = array<i64: 128, 80>}, {pipeline_mode = #tpu.pipeline_mode<synchronous>, transform_indices = @transform_6, window_bounds = array<i64: 80, 128>}, {pipeline_mode = #tpu.pipeline_mode<synchronous>, transform_indices = @transform_7, window_bounds = array<i64: 80, 128>}, {pipeline_mode = #tpu.pipeline_mode<synchronous>, transform_indices = @transform_8, window_bounds = array<i64: 128, 128>}, {transform_indices = @transform_9, window_bounds = array<i64: 1, 16, 128>}]} {
    %c0 = arith.constant 0 : index
    %c0_0 = arith.constant 0 : index
    %c0_1 = arith.constant 0 : index
    %0 = vector.load %arg1[%c0, %c0_0, %c0_1] : memref<1x16x128xf32, #tpu.memory_space<vmem>>, vector<1x16x128xf32>
    %1 = vector.shape_cast %0 : vector<1x16x128xf32> to vector<16x128xf32>
    %cst = arith.constant 0.000000e+00 : f32
    %2 = vector.broadcast %cst : f32 to vector<16x128xf32>
    %c8_i32 = arith.constant 8 : i32
    %3 = tpu.dynamic_rotate %1 by %c8_i32 dim 1 : vector<16x128xf32>, i32 -> vector<16x128xf32>
    %c0_2 = arith.constant 0 : index
    %c0_3 = arith.constant 0 : index
    %4 = vector.load %arg3[%c0_2, %c0_3] : memref<8x128xf32, #tpu.memory_space<vmem>>, vector<1x128xf32>
    %5 = vector.broadcast %4 : vector<1x128xf32> to vector<16x128xf32>
    %6 = arith.mulf %3, %5 : vector<16x128xf32>
    %c1_i32 = arith.constant 1 : i32
    %7 = tpu.dynamic_rotate %6 by %c1_i32 dim 1 : vector<16x128xf32>, i32 -> vector<16x128xf32>
    %c3 = arith.constant 3 : index
    %c0_4 = arith.constant 0 : index
    %8 = vector.load %arg3[%c3, %c0_4] : memref<8x128xf32, #tpu.memory_space<vmem>>, vector<1x128xf32>
    %9 = vector.broadcast %8 : vector<1x128xf32> to vector<16x128xf32>
    %10 = arith.mulf %7, %9 : vector<16x128xf32>
    %c0_5 = arith.constant 0 : index
    %c0_6 = arith.constant 0 : index
    %11 = vector.load %arg2[%c0_5, %c0_6] : memref<16x16xf32, #tpu.memory_space<vmem>>, vector<16x1xf32>
    %12 = vector.broadcast %11 : vector<16x1xf32> to vector<16x128xf32>
    %13 = arith.mulf %10, %12 : vector<16x128xf32>
    %14 = arith.addf %2, %13 : vector<16x128xf32>
    %c0_7 = arith.constant 0 : index
    %c1 = arith.constant 1 : index
    %15 = vector.load %arg2[%c0_7, %c1] : memref<16x16xf32, #tpu.memory_space<vmem>>, vector<16x1xf32>
    %16 = vector.broadcast %15 : vector<16x1xf32> to vector<16x128xf32>
    %17 = arith.mulf %6, %16 : vector<16x128xf32>
    %18 = arith.addf %14, %17 : vector<16x128xf32>
    %c127_i32 = arith.constant 127 : i32
    %19 = tpu.dynamic_rotate %6 by %c127_i32 dim 1 : vector<16x128xf32>, i32 -> vector<16x128xf32>
    %c5 = arith.constant 5 : index
    %c0_8 = arith.constant 0 : index
    %20 = vector.load %arg3[%c5, %c0_8] : memref<8x128xf32, #tpu.memory_space<vmem>>, vector<1x128xf32>
    %21 = vector.broadcast %20 : vector<1x128xf32> to vector<16x128xf32>
    %22 = arith.mulf %19, %21 : vector<16x128xf32>
    %c0_9 = arith.constant 0 : index
    %c2 = arith.constant 2 : index
    %23 = vector.load %arg2[%c0_9, %c2] : memref<16x16xf32, #tpu.memory_space<vmem>>, vector<16x1xf32>
    %24 = vector.broadcast %23 : vector<16x1xf32> to vector<16x128xf32>
    %25 = arith.mulf %22, %24 : vector<16x128xf32>
    %26 = arith.addf %18, %25 : vector<16x128xf32>
    %c1_i32_10 = arith.constant 1 : i32
    %27 = tpu.dynamic_rotate %1 by %c1_i32_10 dim 1 : vector<16x128xf32>, i32 -> vector<16x128xf32>
    %c3_11 = arith.constant 3 : index
    %c0_12 = arith.constant 0 : index
    %28 = vector.load %arg3[%c3_11, %c0_12] : memref<8x128xf32, #tpu.memory_space<vmem>>, vector<1x128xf32>
    %29 = vector.broadcast %28 : vector<1x128xf32> to vector<16x128xf32>
    %30 = arith.mulf %27, %29 : vector<16x128xf32>
    %c0_13 = arith.constant 0 : index
    %c3_14 = arith.constant 3 : index
    %31 = vector.load %arg2[%c0_13, %c3_14] : memref<16x16xf32, #tpu.memory_space<vmem>>, vector<16x1xf32>
    %32 = vector.broadcast %31 : vector<16x1xf32> to vector<16x128xf32>
    %33 = arith.mulf %30, %32 : vector<16x128xf32>
    %34 = arith.addf %26, %33 : vector<16x128xf32>
    %c0_15 = arith.constant 0 : index
    %c4 = arith.constant 4 : index
    %35 = vector.load %arg2[%c0_15, %c4] : memref<16x16xf32, #tpu.memory_space<vmem>>, vector<16x1xf32>
    %36 = vector.broadcast %35 : vector<16x1xf32> to vector<16x128xf32>
    %37 = arith.mulf %1, %36 : vector<16x128xf32>
    %38 = arith.addf %34, %37 : vector<16x128xf32>
    %c127_i32_16 = arith.constant 127 : i32
    %39 = tpu.dynamic_rotate %1 by %c127_i32_16 dim 1 : vector<16x128xf32>, i32 -> vector<16x128xf32>
    %c5_17 = arith.constant 5 : index
    %c0_18 = arith.constant 0 : index
    %40 = vector.load %arg3[%c5_17, %c0_18] : memref<8x128xf32, #tpu.memory_space<vmem>>, vector<1x128xf32>
    %41 = vector.broadcast %40 : vector<1x128xf32> to vector<16x128xf32>
    %42 = arith.mulf %39, %41 : vector<16x128xf32>
    %c0_19 = arith.constant 0 : index
    %c5_20 = arith.constant 5 : index
    %43 = vector.load %arg2[%c0_19, %c5_20] : memref<16x16xf32, #tpu.memory_space<vmem>>, vector<16x1xf32>
    %44 = vector.broadcast %43 : vector<16x1xf32> to vector<16x128xf32>
    %45 = arith.mulf %42, %44 : vector<16x128xf32>
    %46 = arith.addf %38, %45 : vector<16x128xf32>
    %c120_i32 = arith.constant 120 : i32
    %47 = tpu.dynamic_rotate %1 by %c120_i32 dim 1 : vector<16x128xf32>, i32 -> vector<16x128xf32>
    %c2_21 = arith.constant 2 : index
    %c0_22 = arith.constant 0 : index
    %48 = vector.load %arg3[%c2_21, %c0_22] : memref<8x128xf32, #tpu.memory_space<vmem>>, vector<1x128xf32>
    %49 = vector.broadcast %48 : vector<1x128xf32> to vector<16x128xf32>
    %50 = arith.mulf %47, %49 : vector<16x128xf32>
    %c1_i32_23 = arith.constant 1 : i32
    %51 = tpu.dynamic_rotate %50 by %c1_i32_23 dim 1 : vector<16x128xf32>, i32 -> vector<16x128xf32>
    %c3_24 = arith.constant 3 : index
    %c0_25 = arith.constant 0 : index
    %52 = vector.load %arg3[%c3_24, %c0_25] : memref<8x128xf32, #tpu.memory_space<vmem>>, vector<1x128xf32>
    %53 = vector.broadcast %52 : vector<1x128xf32> to vector<16x128xf32>
    %54 = arith.mulf %51, %53 : vector<16x128xf32>
    %c0_26 = arith.constant 0 : index
    %c6 = arith.constant 6 : index
    %55 = vector.load %arg2[%c0_26, %c6] : memref<16x16xf32, #tpu.memory_space<vmem>>, vector<16x1xf32>
    %56 = vector.broadcast %55 : vector<16x1xf32> to vector<16x128xf32>
    %57 = arith.mulf %54, %56 : vector<16x128xf32>
    %58 = arith.addf %46, %57 : vector<16x128xf32>
    %c0_27 = arith.constant 0 : index
    %c7 = arith.constant 7 : index
    %59 = vector.load %arg2[%c0_27, %c7] : memref<16x16xf32, #tpu.memory_space<vmem>>, vector<16x1xf32>
    %60 = vector.broadcast %59 : vector<16x1xf32> to vector<16x128xf32>
    %61 = arith.mulf %50, %60 : vector<16x128xf32>
    %62 = arith.addf %58, %61 : vector<16x128xf32>
    %c127_i32_28 = arith.constant 127 : i32
    %63 = tpu.dynamic_rotate %50 by %c127_i32_28 dim 1 : vector<16x128xf32>, i32 -> vector<16x128xf32>
    %c5_29 = arith.constant 5 : index
    %c0_30 = arith.constant 0 : index
    %64 = vector.load %arg3[%c5_29, %c0_30] : memref<8x128xf32, #tpu.memory_space<vmem>>, vector<1x128xf32>
    %65 = vector.broadcast %64 : vector<1x128xf32> to vector<16x128xf32>
    %66 = arith.mulf %63, %65 : vector<16x128xf32>
    %c0_31 = arith.constant 0 : index
    %c8 = arith.constant 8 : index
    %67 = vector.load %arg2[%c0_31, %c8] : memref<16x16xf32, #tpu.memory_space<vmem>>, vector<16x1xf32>
    %68 = vector.broadcast %67 : vector<16x1xf32> to vector<16x128xf32>
    %69 = arith.mulf %66, %68 : vector<16x128xf32>
    %70 = arith.addf %62, %69 : vector<16x128xf32>
    %c0_32 = arith.constant 0 : index
    %c11 = arith.constant 11 : index
    %71 = vector.load %arg2[%c0_32, %c11] : memref<16x16xf32, #tpu.memory_space<vmem>>, vector<16x1xf32>
    %72 = vector.broadcast %71 : vector<16x1xf32> to vector<16x128xf32>
    %73 = arith.addf %70, %72 : vector<16x128xf32>
    %cst_33 = arith.constant dense<0.000000e+00> : vector<128xf32>
    %74 = vector.multi_reduction <add>, %1, %cst_33 [0] : vector<16x128xf32> to vector<128xf32>
    %75 = vector.shape_cast %74 : vector<128xf32> to vector<1x128xf32>
    %cst_34 = arith.constant 1.600000e+01 : f32
    %76 = vector.broadcast %cst_34 : f32 to vector<1x128xf32>
    %77 = arith.divf %75, %76 : vector<1x128xf32>
    %78 = vector.broadcast %77 : vector<1x128xf32> to vector<16x128xf32>
    %79 = arith.subf %1, %78 : vector<16x128xf32>
    %80 = arith.mulf %79, %79 : vector<16x128xf32>
    %cst_35 = arith.constant dense<0.000000e+00> : vector<128xf32>
    %81 = vector.multi_reduction <add>, %80, %cst_35 [0] : vector<16x128xf32> to vector<128xf32>
    %82 = vector.shape_cast %81 : vector<128xf32> to vector<1x128xf32>
    %cst_36 = arith.constant 1.600000e+01 : f32
    %83 = vector.broadcast %cst_36 : f32 to vector<1x128xf32>
    %84 = arith.divf %82, %83 : vector<1x128xf32>
    %cst_37 = arith.constant 9.99999997E-7 : f32
    %85 = vector.broadcast %cst_37 : f32 to vector<1x128xf32>
    %86 = arith.addf %84, %85 : vector<1x128xf32>
    %87 = math.rsqrt %86 : vector<1x128xf32>
    %88 = vector.broadcast %87 : vector<1x128xf32> to vector<16x128xf32>
    %89 = arith.mulf %79, %88 : vector<16x128xf32>
    %c0_38 = arith.constant 0 : index
    %c9 = arith.constant 9 : index
    %90 = vector.load %arg2[%c0_38, %c9] : memref<16x16xf32, #tpu.memory_space<vmem>>, vector<16x1xf32>
    %91 = vector.broadcast %90 : vector<16x1xf32> to vector<16x128xf32>
    %92 = arith.mulf %89, %91 : vector<16x128xf32>
    %c0_39 = arith.constant 0 : index
    %c10 = arith.constant 10 : index
    %93 = vector.load %arg2[%c0_39, %c10] : memref<16x16xf32, #tpu.memory_space<vmem>>, vector<16x1xf32>
    %94 = vector.broadcast %93 : vector<16x1xf32> to vector<16x128xf32>
    %95 = arith.addf %92, %94 : vector<16x128xf32>
    %96 = arith.truncf %95 : vector<16x128xf32> to vector<16x128xbf16>
    %c0_40 = arith.constant 0 : index
    %c0_41 = arith.constant 0 : index
    %97 = vector.load %arg5[%c0_40, %c0_41] : memref<128x80xbf16, #tpu.memory_space<vmem>>, vector<128x80xbf16>
    %cst_42 = arith.constant dense<0.000000e+00> : vector<16x80xf32>
    %98 = tpu.matmul %96, %97, %cst_42 {dimension_numbers = #tpu.dot_dimension_numbers<[1], [0], [0], [1], [0, 0, 1, 1], [], []>} : vector<16x128xbf16>, vector<128x80xbf16>, vector<16x80xf32> -> vector<16x80xf32>
    %c0_43 = arith.constant 0 : index
    %c0_44 = arith.constant 0 : index
    %99 = vector.load %arg6[%c0_43, %c0_44] : memref<128x80xbf16, #tpu.memory_space<vmem>>, vector<128x80xbf16>
    %cst_45 = arith.constant dense<0.000000e+00> : vector<16x80xf32>
    %100 = tpu.matmul %96, %99, %cst_45 {dimension_numbers = #tpu.dot_dimension_numbers<[1], [0], [0], [1], [0, 0, 1, 1], [], []>} : vector<16x128xbf16>, vector<128x80xbf16>, vector<16x80xf32> -> vector<16x80xf32>
    %101 = arith.truncf %98 : vector<16x80xf32> to vector<16x80xbf16>
    %102 = arith.truncf %100 : vector<16x80xf32> to vector<16x80xbf16>
    %c32 = arith.constant 32 : index
    %c0_46 = arith.constant 0 : index
    %103 = vector.load %arg4[%c32, %c0_46] : memref<96x16xbf16, #tpu.memory_space<vmem>>, vector<16x16xbf16>
    %c48 = arith.constant 48 : index
    %c0_47 = arith.constant 0 : index
    %104 = vector.load %arg4[%c48, %c0_47] : memref<96x16xbf16, #tpu.memory_space<vmem>>, vector<16x16xbf16>
    %c64 = arith.constant 64 : index
    %c0_48 = arith.constant 0 : index
    %105 = vector.load %arg4[%c64, %c0_48] : memref<96x16xbf16, #tpu.memory_space<vmem>>, vector<16x16xbf16>
    %c80 = arith.constant 80 : index
    %c0_49 = arith.constant 0 : index
    %106 = vector.load %arg4[%c80, %c0_49] : memref<96x16xbf16, #tpu.memory_space<vmem>>, vector<16x16xbf16>
    %cst_50 = arith.constant dense<0.000000e+00> : vector<16x80xf32>
    %107 = tpu.matmul %103, %101, %cst_50 {dimension_numbers = #tpu.dot_dimension_numbers<[1], [0], [0], [1], [0, 0, 1, 1], [], []>} : vector<16x16xbf16>, vector<16x80xbf16>, vector<16x80xf32> -> vector<16x80xf32>
    %cst_51 = arith.constant dense<0.000000e+00> : vector<16x80xf32>
    %108 = tpu.matmul %104, %102, %cst_51 {dimension_numbers = #tpu.dot_dimension_numbers<[1], [0], [0], [1], [0, 0, 1, 1], [], []>} : vector<16x16xbf16>, vector<16x80xbf16>, vector<16x80xf32> -> vector<16x80xf32>
    %109 = arith.addf %107, %108 : vector<16x80xf32>
    %cst_52 = arith.constant dense<0.000000e+00> : vector<16x80xf32>
    %110 = tpu.matmul %105, %101, %cst_52 {dimension_numbers = #tpu.dot_dimension_numbers<[1], [0], [0], [1], [0, 0, 1, 1], [], []>} : vector<16x16xbf16>, vector<16x80xbf16>, vector<16x80xf32> -> vector<16x80xf32>
    %cst_53 = arith.constant dense<0.000000e+00> : vector<16x80xf32>
    %111 = tpu.matmul %106, %102, %cst_53 {dimension_numbers = #tpu.dot_dimension_numbers<[1], [0], [0], [1], [0, 0, 1, 1], [], []>} : vector<16x16xbf16>, vector<16x80xbf16>, vector<16x80xf32> -> vector<16x80xf32>
    %112 = arith.addf %110, %111 : vector<16x80xf32>
    %cst_54 = arith.constant 5.000000e-01 : f32
    %113 = vector.broadcast %cst_54 : f32 to vector<16x80xf32>
    %114 = arith.mulf %113, %109 : vector<16x80xf32>
    %cst_55 = arith.constant 4.471500e-02 : f32
    %115 = vector.broadcast %cst_55 : f32 to vector<16x80xf32>
    %116 = arith.mulf %115, %109 : vector<16x80xf32>
    %117 = arith.mulf %116, %109 : vector<16x80xf32>
    %118 = arith.mulf %117, %109 : vector<16x80xf32>
    %119 = arith.addf %109, %118 : vector<16x80xf32>
    %cst_56 = arith.constant 0.797884583 : f32
    %120 = vector.broadcast %cst_56 : f32 to vector<16x80xf32>
    %121 = arith.mulf %120, %119 : vector<16x80xf32>
    %122 = math.tanh %121 : vector<16x80xf32>
    %cst_57 = arith.constant 1.000000e+00 : f32
    %123 = vector.broadcast %cst_57 : f32 to vector<16x80xf32>
    %124 = arith.addf %123, %122 : vector<16x80xf32>
    %125 = arith.mulf %114, %124 : vector<16x80xf32>
    %cst_58 = arith.constant 5.000000e-01 : f32
    %126 = vector.broadcast %cst_58 : f32 to vector<16x80xf32>
    %127 = arith.mulf %126, %112 : vector<16x80xf32>
    %cst_59 = arith.constant 4.471500e-02 : f32
    %128 = vector.broadcast %cst_59 : f32 to vector<16x80xf32>
    %129 = arith.mulf %128, %112 : vector<16x80xf32>
    %130 = arith.mulf %129, %112 : vector<16x80xf32>
    %131 = arith.mulf %130, %112 : vector<16x80xf32>
    %132 = arith.addf %112, %131 : vector<16x80xf32>
    %cst_60 = arith.constant 0.797884583 : f32
    %133 = vector.broadcast %cst_60 : f32 to vector<16x80xf32>
    %134 = arith.mulf %133, %132 : vector<16x80xf32>
    %135 = math.tanh %134 : vector<16x80xf32>
    %cst_61 = arith.constant 1.000000e+00 : f32
    %136 = vector.broadcast %cst_61 : f32 to vector<16x80xf32>
    %137 = arith.addf %136, %135 : vector<16x80xf32>
    %138 = arith.mulf %127, %137 : vector<16x80xf32>
    %139 = arith.truncf %125 : vector<16x80xf32> to vector<16x80xbf16>
    %c0_62 = arith.constant 0 : index
    %c0_63 = arith.constant 0 : index
    %140 = vector.load %arg7[%c0_62, %c0_63] : memref<80x128xbf16, #tpu.memory_space<vmem>>, vector<80x128xbf16>
    %cst_64 = arith.constant dense<0.000000e+00> : vector<16x128xf32>
    %141 = tpu.matmul %139, %140, %cst_64 {dimension_numbers = #tpu.dot_dimension_numbers<[1], [0], [0], [1], [0, 0, 1, 1], [], []>} : vector<16x80xbf16>, vector<80x128xbf16>, vector<16x128xf32> -> vector<16x128xf32>
    %142 = arith.truncf %138 : vector<16x80xf32> to vector<16x80xbf16>
    %c0_65 = arith.constant 0 : index
    %c0_66 = arith.constant 0 : index
    %143 = vector.load %arg8[%c0_65, %c0_66] : memref<80x128xbf16, #tpu.memory_space<vmem>>, vector<80x128xbf16>
    %cst_67 = arith.constant dense<0.000000e+00> : vector<16x128xf32>
    %144 = tpu.matmul %142, %143, %cst_67 {dimension_numbers = #tpu.dot_dimension_numbers<[1], [0], [0], [1], [0, 0, 1, 1], [], []>} : vector<16x80xbf16>, vector<80x128xbf16>, vector<16x128xf32> -> vector<16x128xf32>
    %145 = arith.addf %141, %144 : vector<16x128xf32>
    %c0_68 = arith.constant 0 : index
    %c0_69 = arith.constant 0 : index
    %146 = vector.load %arg4[%c0_68, %c0_69] : memref<96x16xbf16, #tpu.memory_space<vmem>>, vector<16x16xbf16>
    %cst_70 = arith.constant dense<0.000000e+00> : vector<16x128xf32>
    %147 = tpu.matmul %146, %96, %cst_70 {dimension_numbers = #tpu.dot_dimension_numbers<[1], [0], [0], [1], [0, 0, 1, 1], [], []>} : vector<16x16xbf16>, vector<16x128xbf16>, vector<16x128xf32> -> vector<16x128xf32>
    %c0_71 = arith.constant 0 : index
    %c12 = arith.constant 12 : index
    %148 = vector.load %arg2[%c0_71, %c12] : memref<16x16xf32, #tpu.memory_space<vmem>>, vector<16x1xf32>
    %149 = vector.broadcast %148 : vector<16x1xf32> to vector<16x128xf32>
    %150 = arith.addf %147, %149 : vector<16x128xf32>
    %c0_72 = arith.constant 0 : index
    %c13 = arith.constant 13 : index
    %151 = vector.load %arg2[%c0_72, %c13] : memref<16x16xf32, #tpu.memory_space<vmem>>, vector<16x1xf32>
    %152 = vector.broadcast %151 : vector<16x1xf32> to vector<16x128xf32>
    %153 = arith.mulf %152, %145 : vector<16x128xf32>
    %154 = arith.mulf %153, %150 : vector<16x128xf32>
    %cst_73 = arith.constant dense<0xFF800000> : vector<16xf32>
    %155 = vector.multi_reduction <maximumf>, %154, %cst_73 [1] : vector<16x128xf32> to vector<16xf32>
    %156 = vector.shape_cast %155 : vector<16xf32> to vector<16x1xf32>
    %157 = vector.broadcast %156 : vector<16x1xf32> to vector<16x128xf32>
    %158 = arith.subf %154, %157 : vector<16x128xf32>
    %159 = math.exp %158 : vector<16x128xf32>
    %160 = arith.truncf %159 : vector<16x128xf32> to vector<16x128xbf16>
    %c0_74 = arith.constant 0 : index
    %c0_75 = arith.constant 0 : index
    %161 = vector.load %arg9[%c0_74, %c0_75] : memref<128x128xbf16, #tpu.memory_space<vmem>>, vector<128x128xbf16>
    %cst_76 = arith.constant dense<0.000000e+00> : vector<16x128xf32>
    %162 = tpu.matmul %160, %161, %cst_76 {dimension_numbers = #tpu.dot_dimension_numbers<[1], [0], [0], [1], [0, 0, 1, 1], [], []>} : vector<16x128xbf16>, vector<128x128xbf16>, vector<16x128xf32> -> vector<16x128xf32>
    %163 = tpu.reciprocal %162 {approx = true} : vector<16x128xf32> -> vector<16x128xf32>
    %164 = arith.mulf %159, %163 : vector<16x128xf32>
    %165 = arith.addf %164, %73 : vector<16x128xf32>
    %166 = arith.truncf %165 : vector<16x128xf32> to vector<16x128xbf16>
    %c16 = arith.constant 16 : index
    %c0_77 = arith.constant 0 : index
    %167 = vector.load %arg4[%c16, %c0_77] : memref<96x16xbf16, #tpu.memory_space<vmem>>, vector<16x16xbf16>
    %cst_78 = arith.constant dense<0.000000e+00> : vector<16x128xf32>
    %168 = tpu.matmul %167, %166, %cst_78 {dimension_numbers = #tpu.dot_dimension_numbers<[1], [0], [0], [1], [0, 0, 1, 1], [], []>} : vector<16x16xbf16>, vector<16x128xbf16>, vector<16x128xf32> -> vector<16x128xf32>
    %c0_79 = arith.constant 0 : index
    %c14 = arith.constant 14 : index
    %169 = vector.load %arg2[%c0_79, %c14] : memref<16x16xf32, #tpu.memory_space<vmem>>, vector<16x1xf32>
    %170 = vector.broadcast %169 : vector<16x1xf32> to vector<16x128xf32>
    %171 = arith.addf %168, %170 : vector<16x128xf32>
    %172 = arith.addf %171, %1 : vector<16x128xf32>
    %c0_80 = arith.constant 0 : index
    %c0_81 = arith.constant 0 : index
    %c0_82 = arith.constant 0 : index
    %173 = vector.load %arg10[%c0_80, %c0_81, %c0_82] : memref<1x16x128xf32, #tpu.memory_space<vmem>>, vector<1x16x128xf32>
    %174 = vector.shape_cast %173 : vector<1x16x128xf32> to vector<16x128xf32>
    %175 = vector.shape_cast %172 : vector<16x128xf32> to vector<1x16x128xf32>
    tpu.vector_store %arg10[%c0_80, %c0_81, %c0_82], %175 {strides = array<i32>} : memref<1x16x128xf32, #tpu.memory_space<vmem>>, vector<1x16x128xf32>,
    return
  }
  func.func @transform_0(%arg0: i32) -> (i32, i32, i32) {
    %c0_i32 = arith.constant 0 : i32
    %c0_i32_0 = arith.constant 0 : i32
    %c0_i32_1 = arith.constant 0 : i32
    return %arg0, %c0_i32, %c0_i32_0 : i32, i32, i32
  }
  func.func @transform_1(%arg0: i32) -> (i32, i32) {
    %c0_i32 = arith.constant 0 : i32
    %c0_i32_0 = arith.constant 0 : i32
    %c0_i32_1 = arith.constant 0 : i32
    return %c0_i32, %c0_i32_0 : i32, i32
  }
  func.func @transform_2(%arg0: i32) -> (i32, i32) {
    %c0_i32 = arith.constant 0 : i32
    %c0_i32_0 = arith.constant 0 : i32
    %c0_i32_1 = arith.constant 0 : i32
    return %c0_i32, %c0_i32_0 : i32, i32
  }
  func.func @transform_3(%arg0: i32) -> (i32, i32) {
    %c0_i32 = arith.constant 0 : i32
    %c0_i32_0 = arith.constant 0 : i32
    %c0_i32_1 = arith.constant 0 : i32
    return %c0_i32, %c0_i32_0 : i32, i32
  }
  func.func @transform_4(%arg0: i32) -> (i32, i32) {
    %c0_i32 = arith.constant 0 : i32
    %c0_i32_0 = arith.constant 0 : i32
    %c0_i32_1 = arith.constant 0 : i32
    return %c0_i32, %c0_i32_0 : i32, i32
  }
  func.func @transform_5(%arg0: i32) -> (i32, i32) {
    %c0_i32 = arith.constant 0 : i32
    %c0_i32_0 = arith.constant 0 : i32
    %c0_i32_1 = arith.constant 0 : i32
    return %c0_i32, %c0_i32_0 : i32, i32
  }
  func.func @transform_6(%arg0: i32) -> (i32, i32) {
    %c0_i32 = arith.constant 0 : i32
    %c0_i32_0 = arith.constant 0 : i32
    %c0_i32_1 = arith.constant 0 : i32
    return %c0_i32, %c0_i32_0 : i32, i32
  }
  func.func @transform_7(%arg0: i32) -> (i32, i32) {
    %c0_i32 = arith.constant 0 : i32
    %c0_i32_0 = arith.constant 0 : i32
    %c0_i32_1 = arith.constant 0 : i32
    return %c0_i32, %c0_i32_0 : i32, i32
  }
  func.func @transform_8(%arg0: i32) -> (i32, i32) {
    %c0_i32 = arith.constant 0 : i32
    %c0_i32_0 = arith.constant 0 : i32
    %c0_i32_1 = arith.constant 0 : i32
    return %c0_i32, %c0_i32_0 : i32, i32
  }
  func.func @transform_9(%arg0: i32) -> (i32, i32, i32) {
    %c0_i32 = arith.constant 0 : i32
    %c0_i32_0 = arith.constant 0 : i32
    %c0_i32_1 = arith.constant 0 : i32
    return %arg0, %c0_i32, %c0_i32_0 : i32, i32, i32
  }
}

</mosaic_0001>

<llo_original>
// kernel: tpu_custom_call.1
$region0: #{tpu_custom_call.1}
  #allocation0 [shape = 'u32[]', space=smem, size = 0x4, offset = 0x4, fixed_abs, tag = 'smem constant byte address 0x4 - core index']
  #allocation1 [shape = 'u32[72,128]{1,0:T(1,128)}', space=vmem, size = 0x9000, scoped, tag = 'internal scratch']
  %s0 = inlined_call_operand.vmem [shape: f32[1,16,128], index: 0, kind: input, shape index: {}]
  %s1 = inlined_call_operand.vmem [shape: f32[16,16], index: 1, kind: input, shape index: {}]
  %s2 = inlined_call_operand.vmem [shape: f32[8,128], index: 2, kind: input, shape index: {}]
  %s3 = inlined_call_operand.vmem [shape: bf16[96,16], index: 3, kind: input, shape index: {}]
  %s4 = inlined_call_operand.vmem [shape: bf16[128,80], index: 4, kind: input, shape index: {}]
  %s5 = inlined_call_operand.vmem [shape: bf16[128,80], index: 5, kind: input, shape index: {}]
  %s6 = inlined_call_operand.vmem [shape: bf16[80,128], index: 6, kind: input, shape index: {}]
  %s7 = inlined_call_operand.vmem [shape: bf16[80,128], index: 7, kind: input, shape index: {}]
  %s8 = inlined_call_operand.vmem [shape: bf16[128,128], index: 8, kind: input, shape index: {}]
  %s9 = inlined_call_operand.hbm [shape: f32[1,16,128], index: 9, kind: output, shape index: {}]
  %s10 = sld [smem:[#allocation0]]
  $region46: #{tpu_custom_call.1} parent=0
    _
  %s12 = ssub.s32 1, %s10
  %s13 = scalar_select 0, %s12, %s10
  $region1: #{tpu_custom_call.1} parent=0
    #allocation2 [shape = 'u8[8192]{0}', space=vmem, size = 0x2000, scoped, tag = 'output window, operand 0, single buffered']
    #allocation3 [shape = 's32[1]{0}', space=sflag, size = 0x4, scoped, tag = 'scoped memory for tpu_custom_call.1']
    %14 = vsyncpa [#allocation3], 0
    // Predicated region
    $region2: #{tpu_custom_call.1} parent=1 // pred_check
      _
    $region3: #{tpu_custom_call.1} parent=1 // pred_check_branch
      %16 = sbr.rel (0) target = $region5
    $region4: #{tpu_custom_call.1} parent=1 // pred_region
      _
    $region5: #{tpu_custom_call.1} parent=1 // pred_fallthru
      _
    // Predicated region
    $region6: #{tpu_custom_call.1} parent=1 // pred_check
      _
    $region7: #{tpu_custom_call.1} parent=1 // pred_check_branch
      %18 = sbr.rel (0) target = $region9
    $region8: #{tpu_custom_call.1} parent=1 // pred_region
      _
    $region9: #{tpu_custom_call.1} parent=1 // pred_fallthru
      _
    // Predicated region
    $region10: #{tpu_custom_call.1} parent=1 // pred_check
      _
    $region11: #{tpu_custom_call.1} parent=1 // pred_check_branch
      %20 = sbr.rel (0) target = $region13
    $region12: #{tpu_custom_call.1} parent=1 // pred_region
      _
    $region13: #{tpu_custom_call.1} parent=1 // pred_fallthru
      _
    // Predicated region
    $region14: #{tpu_custom_call.1} parent=1 // pred_check
      _
    $region15: #{tpu_custom_call.1} parent=1 // pred_check_branch
      %22 = sbr.rel (0) target = $region17
    $region16: #{tpu_custom_call.1} parent=1 // pred_region
      _
    $region17: #{tpu_custom_call.1} parent=1 // pred_fallthru
      _
    // Predicated region
    $region18: #{tpu_custom_call.1} parent=1 // pred_check
      _
    $region19: #{tpu_custom_call.1} parent=1 // pred_check_branch
      %24 = sbr.rel (0) target = $region21
    $region20: #{tpu_custom_call.1} parent=1 // pred_region
      _
    $region21: #{tpu_custom_call.1} parent=1 // pred_fallthru
      _
    // Predicated region
    $region22: #{tpu_custom_call.1} parent=1 // pred_check
      _
    $region23: #{tpu_custom_call.1} parent=1 // pred_check_branch
      %26 = sbr.rel (0) target = $region25
    $region24: #{tpu_custom_call.1} parent=1 // pred_region
      _
    $region25: #{tpu_custom_call.1} parent=1 // pred_fallthru
      _
    // Predicated region
    $region26: #{tpu_custom_call.1} parent=1 // pred_check
      _
    $region27: #{tpu_custom_call.1} parent=1 // pred_check_branch
      %28 = sbr.rel (0) target = $region29
    $region28: #{tpu_custom_call.1} parent=1 // pred_region
      _
    $region29: #{tpu_custom_call.1} parent=1 // pred_fallthru
      _
    // Predicated region
    $region30: #{tpu_custom_call.1} parent=1 // pred_check
      _
    $region31: #{tpu_custom_call.1} parent=1 // pred_check_branch
      %30 = sbr.rel (0) target = $region33
    $region32: #{tpu_custom_call.1} parent=1 // pred_region
      _
    $region33: #{tpu_custom_call.1} parent=1 // pred_fallthru
      _
    // Predicated region
    $region34: #{tpu_custom_call.1} parent=1 // pred_check
      _
    $region35: #{tpu_custom_call.1} parent=1 // pred_check_branch
      %32 = sbr.rel (0) target = $region37
    $region36: #{tpu_custom_call.1} parent=1 // pred_region
      _
    $region37: #{tpu_custom_call.1} parent=1 // pred_fallthru
      _
    %v34 = vld [vmem:[%s0] sm:$0xff]
    %v35 = vld [vmem:[%s0 + $0x8] sm:$0xff]
    %36 = vrot.lane.b32.xlu0 %v34, 8
    %v37 = vpop.permute.xlu0 %36
    %38 = vrot.lane.b32.xlu0 %v35, 8
    %v39 = vpop.permute.xlu0 %38
    %v40 = vld [vmem:[%s2] sm:$0x1]
    %v41 = vperm.slane %v40, 0
    %v42 = vmul.f32 %v37, %v41
    %v43 = vmul.f32 %v39, %v41
    %44 = vrot.lane.b32.xlu0 %v42, 1
    %v45 = vpop.permute.xlu0 %44
    %46 = vrot.lane.b32.xlu0 %v43, 1
    %v47 = vpop.permute.xlu0 %46
    %v48 = vld [vmem:[%s2 + $0x3] sm:$0x1]
    %v49 = vperm.slane %v48, 0
    %v50 = vmul.f32 %v45, %v49
    %v51 = vmul.f32 %v47, %v49
    %v52 = vld [vmem:[%s1] sm:$0xff]
    %v53 = vld [vmem:[%s1 + $0x8] sm:$0xff]
    %55 = vset.pattern.permute.xlu0 0
    %56 = vperm.xlu0 %55, %v52
    %v57 = vpop.permute.xlu0 %56
    %60 = vset.pattern.permute.xlu0 0
    %61 = vperm.xlu0 %60, %v53
    %v62 = vpop.permute.xlu0 %61
    %v64 = vmul.f32 %v50, %v57
    %v65 = vmul.f32 %v51, %v62
    %v66 = vadd.f32 %v64, 0.0
    %v67 = vadd.f32 %v65, 0.0
    %68 = vset.pattern.permute.xlu0 1
    %69 = vperm.xlu0 %68, %v52
    %v70 = vpop.permute.xlu0 %69
    %72 = vset.pattern.permute.xlu0 1
    %73 = vperm.xlu0 %72, %v53
    %v74 = vpop.permute.xlu0 %73
    %v76 = vmul.f32 %v42, %v70
    %v77 = vmul.f32 %v43, %v74
    %v78 = vadd.f32 %v66, %v76
    %v79 = vadd.f32 %v67, %v77
    %80 = vrot.lane.b32.xlu0 %v42, 127
    %v81 = vpop.permute.xlu0 %80
    %82 = vrot.lane.b32.xlu0 %v43, 127
    %v83 = vpop.permute.xlu0 %82
    %v84 = vld [vmem:[%s2 + $0x5] sm:$0x1]
    %v85 = vperm.slane %v84, 0
    %v86 = vmul.f32 %v81, %v85
    %v87 = vmul.f32 %v83, %v85
    %88 = vset.pattern.permute.xlu0 2
    %89 = vperm.xlu0 %88, %v52
    %v90 = vpop.permute.xlu0 %89
    %92 = vset.pattern.permute.xlu0 2
    %93 = vperm.xlu0 %92, %v53
    %v94 = vpop.permute.xlu0 %93
    %v96 = vmul.f32 %v86, %v90
    %v97 = vmul.f32 %v87, %v94
    %v98 = vadd.f32 %v78, %v96
    %v99 = vadd.f32 %v79, %v97
    %100 = vrot.lane.b32.xlu0 %v34, 1
    %v101 = vpop.permute.xlu0 %100
    %102 = vrot.lane.b32.xlu0 %v35, 1
    %v103 = vpop.permute.xlu0 %102
    %v104 = vmul.f32 %v101, %v49
    %v105 = vmul.f32 %v103, %v49
    %106 = vset.pattern.permute.xlu0 3
    %107 = vperm.xlu0 %106, %v52
    %v108 = vpop.permute.xlu0 %107
    %110 = vset.pattern.permute.xlu0 3
    %111 = vperm.xlu0 %110, %v53
    %v112 = vpop.permute.xlu0 %111
    %v114 = vmul.f32 %v104, %v108
    %v115 = vmul.f32 %v105, %v112
    %v116 = vadd.f32 %v98, %v114
    %v117 = vadd.f32 %v99, %v115
    %118 = vset.pattern.permute.xlu0 4
    %119 = vperm.xlu0 %118, %v52
    %v120 = vpop.permute.xlu0 %119
    %122 = vset.pattern.permute.xlu0 4
    %123 = vperm.xlu0 %122, %v53
    %v124 = vpop.permute.xlu0 %123
    %v126 = vmul.f32 %v34, %v120
    %v127 = vmul.f32 %v35, %v124
    %v128 = vadd.f32 %v116, %v126
    %v129 = vadd.f32 %v117, %v127
    %130 = vrot.lane.b32.xlu0 %v34, 127
    %v131 = vpop.permute.xlu0 %130
    %132 = vrot.lane.b32.xlu0 %v35, 127
    %v133 = vpop.permute.xlu0 %132
    %v134 = vmul.f32 %v131, %v85
    %v135 = vmul.f32 %v133, %v85
    %136 = vset.pattern.permute.xlu0 5
    %137 = vperm.xlu0 %136, %v52
    %v138 = vpop.permute.xlu0 %137
    %140 = vset.pattern.permute.xlu0 5
    %141 = vperm.xlu0 %140, %v53
    %v142 = vpop.permute.xlu0 %141
    %v144 = vmul.f32 %v134, %v138
    %v145 = vmul.f32 %v135, %v142
    %v146 = vadd.f32 %v128, %v144
    %v147 = vadd.f32 %v129, %v145
    %148 = vrot.lane.b32.xlu0 %v34, 120
    %v149 = vpop.permute.xlu0 %148
    %150 = vrot.lane.b32.xlu0 %v35, 120
    %v151 = vpop.permute.xlu0 %150
    %v152 = vld [vmem:[%s2 + $0x2] sm:$0x1]
    %v153 = vperm.slane %v152, 0
    %v154 = vmul.f32 %v149, %v153
    %v155 = vmul.f32 %v151, %v153
    %156 = vrot.lane.b32.xlu0 %v154, 1
    %v157 = vpop.permute.xlu0 %156
    %158 = vrot.lane.b32.xlu0 %v155, 1
    %v159 = vpop.permute.xlu0 %158
    %v160 = vmul.f32 %v157, %v49
    %v161 = vmul.f32 %v159, %v49
    %162 = vset.pattern.permute.xlu0 6
    %163 = vperm.xlu0 %162, %v52
    %v164 = vpop.permute.xlu0 %163
    %166 = vset.pattern.permute.xlu0 6
    %167 = vperm.xlu0 %166, %v53
    %v168 = vpop.permute.xlu0 %167
    %v170 = vmul.f32 %v160, %v164
    %v171 = vmul.f32 %v161, %v168
    %v172 = vadd.f32 %v146, %v170
    %v173 = vadd.f32 %v147, %v171
    %174 = vset.pattern.permute.xlu0 7
    %175 = vperm.xlu0 %174, %v52
    %v176 = vpop.permute.xlu0 %175
    %178 = vset.pattern.permute.xlu0 7
    %179 = vperm.xlu0 %178, %v53
    %v180 = vpop.permute.xlu0 %179
    %v182 = vmul.f32 %v154, %v176
    %v183 = vmul.f32 %v155, %v180
    %v184 = vadd.f32 %v172, %v182
    %v185 = vadd.f32 %v173, %v183
    %186 = vrot.lane.b32.xlu0 %v154, 127
    %v187 = vpop.permute.xlu0 %186
    %188 = vrot.lane.b32.xlu0 %v155, 127
    %v189 = vpop.permute.xlu0 %188
    %v190 = vmul.f32 %v187, %v85
    %v191 = vmul.f32 %v189, %v85
    %192 = vset.pattern.permute.xlu0 8
    %193 = vperm.xlu0 %192, %v52
    %v194 = vpop.permute.xlu0 %193
    %196 = vset.pattern.permute.xlu0 8
    %197 = vperm.xlu0 %196, %v53
    %v198 = vpop.permute.xlu0 %197
    %v200 = vmul.f32 %v190, %v194
    %v201 = vmul.f32 %v191, %v198
    %v202 = vadd.f32 %v184, %v200
    %v203 = vadd.f32 %v185, %v201
    %204 = vset.pattern.permute.xlu0 11
    %205 = vperm.xlu0 %204, %v52
    %v206 = vpop.permute.xlu0 %205
    %208 = vset.pattern.permute.xlu0 11
    %209 = vperm.xlu0 %208, %v53
    %v210 = vpop.permute.xlu0 %209
    %v212 = vadd.f32 %v202, %v206
    %v213 = vadd.f32 %v203, %v210
    %v214 = vadd.f32 %v34, %v35
    %v215 = vrot.slane %v214, 4
    %v216 = vadd.f32 %v214, %v215
    %v217 = vrot.slane %v216, 2
    %v218 = vadd.f32 %v216, %v217
    %v219 = vrot.slane %v218, 1
    %v220 = vadd.f32 %v218, %v219
    %v221 = vrcp.pop 16.0
    %v222 = vmul.f32 16.0, %v221
    %v223 = vsub.f32 1.0, %v222
    %v224 = vmul.f32 %v221, %v223
    %v225 = vadd.f32 %v221, %v224
    %vm226 = vweird.f32 %v221
    %v227 = vsel %vm226, %v221, %v225
    %v228 = vmul.f32 %v220, %v227
    %v229 = vsub.f32 %v34, %v228
    %v230 = vsub.f32 %v35, %v228
    %v231 = vmul.f32 %v229, %v229
    %v232 = vmul.f32 %v230, %v230
    %v233 = vadd.f32 %v231, %v232
    %v234 = vrot.slane %v233, 4
    %v235 = vadd.f32 %v233, %v234
    %v236 = vrot.slane %v235, 2
    %v237 = vadd.f32 %v235, %v236
    %v238 = vrot.slane %v237, 1
    %v239 = vadd.f32 %v237, %v238
    %v240 = vmul.f32 %v239, %v227
    %v241 = vadd.f32 %v240, 1e-06
    %v242 = vrsqrt.pop %v241
    %v243 = vmul.f32 %v242, %v241
    %v244 = vmul.f32 %v243, %v242
    %v245 = vmul.f32 0.5, %v244
    %v246 = vsub.f32 1.5, %v245
    %v247 = vmul.f32 %v242, %v246
    %vm248 = vweird.f32 %v241
    %vm249 = vweird.f32 %v242
    %vm250 = vmor %vm248, %vm249
    %v251 = vsel %vm250, %v242, %v247
    %v252 = vmul.f32 %v229, %v251
    %v253 = vmul.f32 %v230, %v251
    %254 = vset.pattern.permute.xlu0 9
    %255 = vperm.xlu0 %254, %v52
    %v256 = vpop.permute.xlu0 %255
    %258 = vset.pattern.permute.xlu0 9
    %259 = vperm.xlu0 %258, %v53
    %v260 = vpop.permute.xlu0 %259
    %v262 = vmul.f32 %v252, %v256
    %v263 = vmul.f32 %v253, %v260
    %264 = vset.pattern.permute.xlu0 10
    %265 = vperm.xlu0 %264, %v52
    %v266 = vpop.permute.xlu0 %265
    %268 = vset.pattern.permute.xlu0 10
    %269 = vperm.xlu0 %268, %v53
    %v270 = vpop.permute.xlu0 %269
    %v272 = vadd.f32 %v262, %v266
    %v273 = vadd.f32 %v263, %v270
    %v274 = vpack.c.bf16 %v273, %v272
    %v275 = vld [vmem:[%s4] sm:$0xf]
    %v276 = vld [vmem:[%s4 + $0x4] sm:$0xf]
    %v277 = vld [vmem:[%s4 + $0x8] sm:$0xf]
    %v278 = vld [vmem:[%s4 + $0xc] sm:$0xf]
    %v279 = vld [vmem:[%s4 + $0x10] sm:$0xf]
    %v280 = vld [vmem:[%s4 + $0x14] sm:$0xf]
    %v281 = vld [vmem:[%s4 + $0x18] sm:$0xf]
    %v282 = vld [vmem:[%s4 + $0x1c] sm:$0xf]
    %v283 = vld [vmem:[%s4 + $0x20] sm:$0xf]
    %v284 = vld [vmem:[%s4 + $0x24] sm:$0xf]
    %v285 = vld [vmem:[%s4 + $0x28] sm:$0xf]
    %v286 = vld [vmem:[%s4 + $0x2c] sm:$0xf]
    %v287 = vld [vmem:[%s4 + $0x30] sm:$0xf]
    %v288 = vld [vmem:[%s4 + $0x34] sm:$0xf]
    %v289 = vld [vmem:[%s4 + $0x38] sm:$0xf]
    %v290 = vld [vmem:[%s4 + $0x3c] sm:$0xf]
    %v307 = vunpack.c.l.b16 %v275
    %v308 = vunpack.c.l.b16 %v276
    %v309 = vunpack.c.l.b16 %v277
    %v310 = vunpack.c.l.b16 %v278
    %v311 = vunpack.c.l.b16 %v279
    %v312 = vunpack.c.l.b16 %v280
    %v313 = vunpack.c.l.b16 %v281
    %v314 = vunpack.c.l.b16 %v282
    %v315 = vunpack.c.l.b16 %v283
    %v316 = vunpack.c.l.b16 %v284
    %v317 = vunpack.c.l.b16 %v285
    %v318 = vunpack.c.l.b16 %v286
    %v319 = vunpack.c.l.b16 %v287
    %v320 = vunpack.c.l.b16 %v288
    %v321 = vunpack.c.l.b16 %v289
    %v322 = vunpack.c.l.b16 %v290
    %v323 = vpack.c.b16 %v308, %v307
    %v324 = vpack.c.b16 %v310, %v309
    %v325 = vpack.c.b16 %v312, %v311
    %v326 = vpack.c.b16 %v314, %v313
    %v327 = vpack.c.b16 %v316, %v315
    %v328 = vpack.c.b16 %v318, %v317
    %v329 = vpack.c.b16 %v320, %v319
    %v330 = vpack.c.b16 %v322, %v321
    %339 = vmatpush.bf16.msra.mxu0 %v330
    %340 = vmatpush.bf16.msra.mxu0 %v329
    %341 = vmatpush.bf16.msra.mxu0 %v328
    %342 = vmatpush.bf16.msra.mxu0 %v327
    %343 = vmatpush.bf16.msra.mxu0 %v326
    %344 = vmatpush.bf16.msra.mxu0 %v325
    %345 = vmatpush.bf16.msra.mxu0 %v324
    %346 = vmatpush.bf16.msra.mxu0 %v323
    %347 = vmatmul.bf16.gmra.mxu0 %v274
    %v348 = vpop.f32.mrf.mxu0
    %v349 = vadd.f32 0.0, %v348
    %v350 = vpop.f32.mrf.mxu0
    %v351 = vadd.f32 0.0, %v350
    %352 = vdwg.mxu0
    %v353 = vld [vmem:[%s5] sm:$0xf]
    %v354 = vld [vmem:[%s5 + $0x4] sm:$0xf]
    %v355 = vld [vmem:[%s5 + $0x8] sm:$0xf]
    %v356 = vld [vmem:[%s5 + $0xc] sm:$0xf]
    %v357 = vld [vmem:[%s5 + $0x10] sm:$0xf]
    %v358 = vld [vmem:[%s5 + $0x14] sm:$0xf]
    %v359 = vld [vmem:[%s5 + $0x18] sm:$0xf]
    %v360 = vld [vmem:[%s5 + $0x1c] sm:$0xf]
    %v361 = vld [vmem:[%s5 + $0x20] sm:$0xf]
    %v362 = vld [vmem:[%s5 + $0x24] sm:$0xf]
    %v363 = vld [vmem:[%s5 + $0x28] sm:$0xf]
    %v364 = vld [vmem:[%s5 + $0x2c] sm:$0xf]
    %v365 = vld [vmem:[%s5 + $0x30] sm:$0xf]
    %v366 = vld [vmem:[%s5 + $0x34] sm:$0xf]
    %v367 = vld [vmem:[%s5 + $0x38] sm:$0xf]
    %v368 = vld [vmem:[%s5 + $0x3c] sm:$0xf]
    %v385 = vunpack.c.l.b16 %v353
    %v386 = vunpack.c.l.b16 %v354
    %v387 = vunpack.c.l.b16 %v355
    %v388 = vunpack.c.l.b16 %v356
    %v389 = vunpack.c.l.b16 %v357
    %v390 = vunpack.c.l.b16 %v358
    %v391 = vunpack.c.l.b16 %v359
    %v392 = vunpack.c.l.b16 %v360
    %v393 = vunpack.c.l.b16 %v361
    %v394 = vunpack.c.l.b16 %v362
    %v395 = vunpack.c.l.b16 %v363
    %v396 = vunpack.c.l.b16 %v364
    %v397 = vunpack.c.l.b16 %v365
    %v398 = vunpack.c.l.b16 %v366
    %v399 = vunpack.c.l.b16 %v367
    %v400 = vunpack.c.l.b16 %v368
    %v401 = vpack.c.b16 %v386, %v385
    %v402 = vpack.c.b16 %v388, %v387
    %v403 = vpack.c.b16 %v390, %v389
    %v404 = vpack.c.b16 %v392, %v391
    %v405 = vpack.c.b16 %v394, %v393
    %v406 = vpack.c.b16 %v396, %v395
    %v407 = vpack.c.b16 %v398, %v397
    %v408 = vpack.c.b16 %v400, %v399
    %417 = vmatpush.bf16.msra.mxu0 %v408
    %418 = vmatpush.bf16.msra.mxu0 %v407
    %419 = vmatpush.bf16.msra.mxu0 %v406
    %420 = vmatpush.bf16.msra.mxu0 %v405
    %421 = vmatpush.bf16.msra.mxu0 %v404
    %422 = vmatpush.bf16.msra.mxu0 %v403
    %423 = vmatpush.bf16.msra.mxu0 %v402
    %424 = vmatpush.bf16.msra.mxu0 %v401
    %425 = vmatmul.bf16.gmra.mxu0 %v274
    %v426 = vpop.f32.mrf.mxu0
    %v427 = vadd.f32 0.0, %v426
    %v428 = vpop.f32.mrf.mxu0
    %v429 = vadd.f32 0.0, %v428
    %430 = vdwg.mxu0
    %v431 = vpack.c.bf16 %v351, %v349
    %v432 = vpack.c.bf16 %v429, %v427
    %v433 = vld [vmem:[%s3 + $0x10] sm:$0xf]
    %v434 = vld [vmem:[%s3 + $0x14] sm:$0xf]
    %v435 = vld [vmem:[%s3 + $0x18] sm:$0xf]
    %v436 = vld [vmem:[%s3 + $0x1c] sm:$0xf]
    %v437 = vld [vmem:[%s3 + $0x20] sm:$0xf]
    %v438 = vld [vmem:[%s3 + $0x24] sm:$0xf]
    %v439 = vld [vmem:[%s3 + $0x28] sm:$0xf]
    %v440 = vld [vmem:[%s3 + $0x2c] sm:$0xf]
    %v443 = vunpack.c.l.b16 %v435
    %v444 = vunpack.c.l.b16 %v436
    %v445 = vpack.c.b16 %v444, %v443
    %vm446 = vcmask 130048
    %v448 = vsel %vm446, %v445, 0
    %450 = vmatpush.bf16.msra.mxu0 0
    %451 = vmatpush.bf16.msra.mxu0 0
    %452 = vmatpush.bf16.msra.mxu0 0
    %453 = vmatpush.bf16.msra.mxu0 0
    %454 = vmatpush.bf16.msra.mxu0 0
    %455 = vmatpush.bf16.msra.mxu0 0
    %456 = vmatpush.bf16.msra.mxu0 0
    %457 = vmatpush.bf16.msra.mxu0 %v432
    %458 = vmatmul.bf16.gmra.mxu0 %v448
    %v459 = vpop.f32.mrf.mxu0
    %v460 = vadd.f32 0.0, %v459
    %v461 = vpop.f32.mrf.mxu0
    %v462 = vadd.f32 0.0, %v461
    %463 = vdwg.mxu0
    %v466 = vunpack.c.l.b16 %v433
    %v467 = vunpack.c.l.b16 %v434
    %v468 = vpack.c.b16 %v467, %v466
    %v470 = vsel %vm446, %v468, 0
    %472 = vmatpush.bf16.msra.mxu0 0
    %473 = vmatpush.bf16.msra.mxu0 0
    %474 = vmatpush.bf16.msra.mxu0 0
    %475 = vmatpush.bf16.msra.mxu0 0
    %476 = vmatpush.bf16.msra.mxu0 0
    %477 = vmatpush.bf16.msra.mxu0 0
    %478 = vmatpush.bf16.msra.mxu0 0
    %479 = vmatpush.bf16.msra.mxu0 %v431
    %480 = vmatmul.bf16.gmra.mxu0 %v470
    %v481 = vpop.f32.mrf.mxu0
    %v482 = vadd.f32 %v460, %v481
    %v483 = vpop.f32.mrf.mxu0
    %v484 = vadd.f32 %v462, %v483
    %485 = vdwg.mxu0
    %v488 = vunpack.c.l.b16 %v439
    %v489 = vunpack.c.l.b16 %v440
    %v490 = vpack.c.b16 %v489, %v488
    %v492 = vsel %vm446, %v490, 0
    %494 = vmatpush.bf16.msra.mxu0 0
    %495 = vmatpush.bf16.msra.mxu0 0
    %496 = vmatpush.bf16.msra.mxu0 0
    %497 = vmatpush.bf16.msra.mxu0 0
    %498 = vmatpush.bf16.msra.mxu0 0
    %499 = vmatpush.bf16.msra.mxu0 0
    %500 = vmatpush.bf16.msra.mxu0 0
    %501 = vmatpush.bf16.msra.mxu0 %v432
    %502 = vmatmul.bf16.gmra.mxu0 %v492
    %v503 = vpop.f32.mrf.mxu0
    %v504 = vadd.f32 0.0, %v503
    %v505 = vpop.f32.mrf.mxu0
    %v506 = vadd.f32 0.0, %v505
    %507 = vdwg.mxu0
    %v510 = vunpack.c.l.b16 %v437
    %v511 = vunpack.c.l.b16 %v438
    %v512 = vpack.c.b16 %v511, %v510
    %v514 = vsel %vm446, %v512, 0
    %516 = vmatpush.bf16.msra.mxu0 0
    %517 = vmatpush.bf16.msra.mxu0 0
    %518 = vmatpush.bf16.msra.mxu0 0
    %519 = vmatpush.bf16.msra.mxu0 0
    %520 = vmatpush.bf16.msra.mxu0 0
    %521 = vmatpush.bf16.msra.mxu0 0
    %522 = vmatpush.bf16.msra.mxu0 0
    %523 = vmatpush.bf16.msra.mxu0 %v431
    %524 = vmatmul.bf16.gmra.mxu0 %v514
    %v525 = vpop.f32.mrf.mxu0
    %v526 = vadd.f32 %v504, %v525
    %v527 = vpop.f32.mrf.mxu0
    %v528 = vadd.f32 %v506, %v527
    %529 = vdwg.mxu0
    %v530 = vmul.f32 %v482, 0.5
    %v531 = vmul.f32 %v484, 0.5
    %v532 = vmul.f32 %v482, 0.044715
    %v533 = vmul.f32 %v484, 0.044715
    %v534 = vmul.f32 %v532, %v482
    %v535 = vmul.f32 %v533, %v484
    %v536 = vmul.f32 %v534, %v482
    %v537 = vmul.f32 %v535, %v484
    %v538 = vadd.f32 %v482, %v536
    %v539 = vadd.f32 %v484, %v537
    %v540 = vmul.f32 %v538, 0.7978846
    %v541 = vmul.f32 %v539, 0.7978846
    %v542 = vtanh.pop %v540
    %v543 = vtanh.pop %v541
    %v544 = vadd.f32 %v542, 1.0
    %v545 = vadd.f32 %v543, 1.0
    %v546 = vmul.f32 %v530, %v544
    %v547 = vmul.f32 %v531, %v545
    %v548 = vmul.f32 %v526, 0.5
    %v549 = vmul.f32 %v528, 0.5
    %v550 = vmul.f32 %v526, 0.044715
    %v551 = vmul.f32 %v528, 0.044715
    %v552 = vmul.f32 %v550, %v526
    %v553 = vmul.f32 %v551, %v528
    %v554 = vmul.f32 %v552, %v526
    %v555 = vmul.f32 %v553, %v528
    %v556 = vadd.f32 %v526, %v554
    %v557 = vadd.f32 %v528, %v555
    %v558 = vmul.f32 %v556, 0.7978846
    %v559 = vmul.f32 %v557, 0.7978846
    %v560 = vtanh.pop %v558
    %v561 = vtanh.pop %v559
    %v562 = vadd.f32 %v560, 1.0
    %v563 = vadd.f32 %v561, 1.0
    %v564 = vmul.f32 %v548, %v562
    %v565 = vmul.f32 %v549, %v563
    %v566 = vpack.c.bf16 %v547, %v546
    %v567 = vld [vmem:[%s6] sm:$0xf]
    %v568 = vld [vmem:[%s6 + $0x4] sm:$0xf]
    %v569 = vld [vmem:[%s6 + $0x8] sm:$0xf]
    %v570 = vld [vmem:[%s6 + $0xc] sm:$0xf]
    %v571 = vld [vmem:[%s6 + $0x10] sm:$0xf]
    %v572 = vld [vmem:[%s6 + $0x14] sm:$0xf]
    %v573 = vld [vmem:[%s6 + $0x18] sm:$0xf]
    %v574 = vld [vmem:[%s6 + $0x1c] sm:$0xf]
    %v575 = vld [vmem:[%s6 + $0x20] sm:$0xf]
    %v576 = vld [vmem:[%s6 + $0x24] sm:$0xf]
    %v577 = vpack.c.bf16 %v565, %v564
    %v578 = vld [vmem:[%s7] sm:$0xf]
    %v579 = vld [vmem:[%s7 + $0x4] sm:$0xf]
    %v580 = vld [vmem:[%s7 + $0x8] sm:$0xf]
    %v581 = vld [vmem:[%s7 + $0xc] sm:$0xf]
    %v582 = vld [vmem:[%s7 + $0x10] sm:$0xf]
    %v583 = vld [vmem:[%s7 + $0x14] sm:$0xf]
    %v584 = vld [vmem:[%s7 + $0x18] sm:$0xf]
    %v585 = vld [vmem:[%s7 + $0x1c] sm:$0xf]
    %v586 = vld [vmem:[%s7 + $0x20] sm:$0xf]
    %v587 = vld [vmem:[%s7 + $0x24] sm:$0xf]
    %v598 = vunpack.c.l.b16 %v578
    %v599 = vunpack.c.l.b16 %v579
    %v600 = vunpack.c.l.b16 %v580
    %v601 = vunpack.c.l.b16 %v581
    %v602 = vunpack.c.l.b16 %v582
    %v603 = vunpack.c.l.b16 %v583
    %v604 = vunpack.c.l.b16 %v584
    %v605 = vunpack.c.l.b16 %v585
    %v606 = vunpack.c.l.b16 %v586
    %v607 = vunpack.c.l.b16 %v587
    %v608 = vpack.c.b16 %v599, %v598
    %v609 = vpack.c.b16 %v601, %v600
    %v610 = vpack.c.b16 %v603, %v602
    %v611 = vpack.c.b16 %v605, %v604
    %v612 = vpack.c.b16 %v607, %v606
    %vm618 = vcmask 654336
    %v620 = vsel %vm618, %v577, 0
    %622 = vmatpush.bf16.msra.mxu0 0
    %623 = vmatpush.bf16.msra.mxu0 0
    %624 = vmatpush.bf16.msra.mxu0 0
    %625 = vmatpush.bf16.msra.mxu0 %v612
    %626 = vmatpush.bf16.msra.mxu0 %v611
    %627 = vmatpush.bf16.msra.mxu0 %v610
    %628 = vmatpush.bf16.msra.mxu0 %v609
    %629 = vmatpush.bf16.msra.mxu0 %v608
    %630 = vmatmul.bf16.gmra.mxu0 %v620
    %v631 = vpop.f32.mrf.mxu0
    %v632 = vadd.f32 0.0, %v631
    %v633 = vpop.f32.mrf.mxu0
    %v634 = vadd.f32 0.0, %v633
    %635 = vdwg.mxu0
    %v646 = vunpack.c.l.b16 %v567
    %v647 = vunpack.c.l.b16 %v568
    %v648 = vunpack.c.l.b16 %v569
    %v649 = vunpack.c.l.b16 %v570
    %v650 = vunpack.c.l.b16 %v571
    %v651 = vunpack.c.l.b16 %v572
    %v652 = vunpack.c.l.b16 %v573
    %v653 = vunpack.c.l.b16 %v574
    %v654 = vunpack.c.l.b16 %v575
    %v655 = vunpack.c.l.b16 %v576
    %v656 = vpack.c.b16 %v647, %v646
    %v657 = vpack.c.b16 %v649, %v648
    %v658 = vpack.c.b16 %v651, %v650
    %v659 = vpack.c.b16 %v653, %v652
    %v660 = vpack.c.b16 %v655, %v654
    %v667 = vsel %vm618, %v566, 0
    %669 = vmatpush.bf16.msra.mxu0 0
    %670 = vmatpush.bf16.msra.mxu0 0
    %671 = vmatpush.bf16.msra.mxu0 0
    %672 = vmatpush.bf16.msra.mxu0 %v660
    %673 = vmatpush.bf16.msra.mxu0 %v659
    %674 = vmatpush.bf16.msra.mxu0 %v658
    %675 = vmatpush.bf16.msra.mxu0 %v657
    %676 = vmatpush.bf16.msra.mxu0 %v656
    %677 = vmatmul.bf16.gmra.mxu0 %v667
    %v678 = vpop.f32.mrf.mxu0
    %v679 = vadd.f32 %v632, %v678
    %v680 = vpop.f32.mrf.mxu0
    %v681 = vadd.f32 %v634, %v680
    %682 = vdwg.mxu0
    %v683 = vld [vmem:[%s3] sm:$0xf]
    %v684 = vld [vmem:[%s3 + $0x4] sm:$0xf]
    %685 = vset.pattern.permute.xlu0 12
    %686 = vperm.xlu0 %685, %v52
    %v687 = vpop.permute.xlu0 %686
    %689 = vset.pattern.permute.xlu0 12
    %690 = vperm.xlu0 %689, %v53
    %v691 = vpop.permute.xlu0 %690
    %v695 = vunpack.c.l.b16 %v683
    %v696 = vunpack.c.l.b16 %v684
    %v697 = vpack.c.b16 %v696, %v695
    %v699 = vsel %vm446, %v697, 0
    %701 = vmatpush.bf16.msra.mxu0 0
    %702 = vmatpush.bf16.msra.mxu0 0
    %703 = vmatpush.bf16.msra.mxu0 0
    %704 = vmatpush.bf16.msra.mxu0 0
    %705 = vmatpush.bf16.msra.mxu0 0
    %706 = vmatpush.bf16.msra.mxu0 0
    %707 = vmatpush.bf16.msra.mxu0 0
    %708 = vmatpush.bf16.msra.mxu0 %v274
    %709 = vmatmul.bf16.gmra.mxu0 %v699
    %v710 = vpop.f32.mrf.mxu0
    %v711 = vadd.f32 %v687, %v710
    %v712 = vpop.f32.mrf.mxu0
    %v713 = vadd.f32 %v691, %v712
    %714 = vdwg.mxu0
    %715 = vset.pattern.permute.xlu0 13
    %716 = vperm.xlu0 %715, %v52
    %v717 = vpop.permute.xlu0 %716
    %719 = vset.pattern.permute.xlu0 13
    %720 = vperm.xlu0 %719, %v53
    %v721 = vpop.permute.xlu0 %720
    %v723 = vmul.f32 %v717, %v679
    %v724 = vmul.f32 %v721, %v681
    %v725 = vmul.f32 %v723, %v711
    %v726 = vmul.f32 %v724, %v713
    %727 = vmax.xlane.f32.xlu0 %v725
    %v728 = vpop.xlane.xlu0 %727
    %729 = vmax.xlane.f32.xlu0 %v726
    %v730 = vpop.xlane.xlu0 %729
    %v731 = vsub.f32 %v725, %v728
    %v732 = vsub.f32 %v726, %v730
    %v733 = vmul.f32 %v731, 1.442695
    %v734 = vpow.pop %v733
    %v735 = vmul.f32 %v732, 1.442695
    %v736 = vpow.pop %v735
    %v737 = vpack.c.bf16 %v736, %v734
    %v738 = vld [vmem:[%s8] sm:$0xf]
    %v739 = vld [vmem:[%s8 + $0x4] sm:$0xf]
    %v740 = vld [vmem:[%s8 + $0x8] sm:$0xf]
    %v741 = vld [vmem:[%s8 + $0xc] sm:$0xf]
    %v742 = vld [vmem:[%s8 + $0x10] sm:$0xf]
    %v743 = vld [vmem:[%s8 + $0x14] sm:$0xf]
    %v744 = vld [vmem:[%s8 + $0x18] sm:$0xf]
    %v745 = vld [vmem:[%s8 + $0x1c] sm:$0xf]
    %v746 = vld [vmem:[%s8 + $0x20] sm:$0xf]
    %v747 = vld [vmem:[%s8 + $0x24] sm:$0xf]
    %v748 = vld [vmem:[%s8 + $0x28] sm:$0xf]
    %v749 = vld [vmem:[%s8 + $0x2c] sm:$0xf]
    %v750 = vld [vmem:[%s8 + $0x30] sm:$0xf]
    %v751 = vld [vmem:[%s8 + $0x34] sm:$0xf]
    %v752 = vld [vmem:[%s8 + $0x38] sm:$0xf]
    %v753 = vld [vmem:[%s8 + $0x3c] sm:$0xf]
    %v770 = vunpack.c.l.b16 %v738
    %v771 = vunpack.c.l.b16 %v739
    %v772 = vunpack.c.l.b16 %v740
    %v773 = vunpack.c.l.b16 %v741
    %v774 = vunpack.c.l.b16 %v742
    %v775 = vunpack.c.l.b16 %v743
    %v776 = vunpack.c.l.b16 %v744
    %v777 = vunpack.c.l.b16 %v745
    %v778 = vunpack.c.l.b16 %v746
    %v779 = vunpack.c.l.b16 %v747
    %v780 = vunpack.c.l.b16 %v748
    %v781 = vunpack.c.l.b16 %v749
    %v782 = vunpack.c.l.b16 %v750
    %v783 = vunpack.c.l.b16 %v751
    %v784 = vunpack.c.l.b16 %v752
    %v785 = vunpack.c.l.b16 %v753
    %v786 = vpack.c.b16 %v771, %v770
    %v787 = vpack.c.b16 %v773, %v772
    %v788 = vpack.c.b16 %v775, %v774
    %v789 = vpack.c.b16 %v777, %v776
    %v790 = vpack.c.b16 %v779, %v778
    %v791 = vpack.c.b16 %v781, %v780
    %v792 = vpack.c.b16 %v783, %v782
    %v793 = vpack.c.b16 %v785, %v784
    %802 = vmatpush.bf16.msra.mxu0 %v793
    %803 = vmatpush.bf16.msra.mxu0 %v792
    %804 = vmatpush.bf16.msra.mxu0 %v791
    %805 = vmatpush.bf16.msra.mxu0 %v790
    %806 = vmatpush.bf16.msra.mxu0 %v789
    %807 = vmatpush.bf16.msra.mxu0 %v788
    %808 = vmatpush.bf16.msra.mxu0 %v787
    %809 = vmatpush.bf16.msra.mxu0 %v786
    %810 = vmatmul.bf16.gmra.mxu0 %v737
    %v811 = vpop.f32.mrf.mxu0
    %v812 = vadd.f32 0.0, %v811
    %v813 = vpop.f32.mrf.mxu0
    %v814 = vadd.f32 0.0, %v813
    %815 = vdwg.mxu0
    %v816 = vrcp.pop %v812
    %v817 = vrcp.pop %v814
    %v818 = vmul.f32 %v734, %v816
    %v819 = vmul.f32 %v736, %v817
    %v820 = vadd.f32 %v818, %v212
    %v821 = vadd.f32 %v819, %v213
    %v822 = vpack.c.bf16 %v821, %v820
    %v823 = vld [vmem:[%s3 + $0x8] sm:$0xf]
    %v824 = vld [vmem:[%s3 + $0xc] sm:$0xf]
    %825 = vset.pattern.permute.xlu0 14
    %826 = vperm.xlu0 %825, %v52
    %v827 = vpop.permute.xlu0 %826
    %829 = vset.pattern.permute.xlu0 14
    %830 = vperm.xlu0 %829, %v53
    %v831 = vpop.permute.xlu0 %830
    %v835 = vunpack.c.l.b16 %v823
    %v836 = vunpack.c.l.b16 %v824
    %v837 = vpack.c.b16 %v836, %v835
    %v839 = vsel %vm446, %v837, 0
    %841 = vmatpush.bf16.msra.mxu0 0
    %842 = vmatpush.bf16.msra.mxu0 0
    %843 = vmatpush.bf16.msra.mxu0 0
    %844 = vmatpush.bf16.msra.mxu0 0
    %845 = vmatpush.bf16.msra.mxu0 0
    %846 = vmatpush.bf16.msra.mxu0 0
    %847 = vmatpush.bf16.msra.mxu0 0
    %848 = vmatpush.bf16.msra.mxu0 %v822
    %849 = vmatmul.bf16.gmra.mxu0 %v839
    %v850 = vpop.f32.mrf.mxu0
    %v851 = vadd.f32 %v827, %v850
    %v852 = vpop.f32.mrf.mxu0
    %v853 = vadd.f32 %v831, %v852
    %854 = vdwg.mxu0
    %v855 = vadd.f32 %v851, %v34
    %v856 = vadd.f32 %v853, %v35
    %857 = vst [vmem:[#allocation2] sm:$0xff] %v855
    %858 = vst [vmem:[#allocation2 + $0x8] sm:$0xff] %v856
    // Predicated region
    $region38: #{tpu_custom_call.1} parent=1 // pred_check
      _
    $region39: #{tpu_custom_call.1} parent=1 // pred_check_branch
      %860 = sbr.rel (0) target = $region41
    $region40: #{tpu_custom_call.1} parent=1 // pred_region
      %862 = vsyncadd [#allocation3], 0
      %s863 = sshll.u32 [#allocation2], 4
      %s864 = int_to_ptr.vmem [resolvable:$true] %s863
      %s865 = sshll.u32 %s9, 4
      %s866 = int_to_ptr.hbm [resolvable:$true] %s865
      %871 = dma.vmem_to_hbm [thread:$0]  %s864, 256, %s866, [#allocation3], 128, 128, 8
    $region41: #{tpu_custom_call.1} parent=1 // pred_fallthru
      _
    // Predicated region
    $region42: #{tpu_custom_call.1} parent=1 // pred_check
      _
    $region43: #{tpu_custom_call.1} parent=1 // pred_check_branch
      %873 = sbr.rel (0) target = $region45
    $region44: #{tpu_custom_call.1} parent=1 // pred_region
      %875 = dma.done [#allocation3], 256
    $region45: #{tpu_custom_call.1} parent=1 // pred_fallthru
      _
    %876 = vsyncpa [#allocation3], 1

</llo_original>
